<compile_context>
chip_gen: v5e
topology: v5e:2x2
jax: 0.10.0
libtpu: 0.0.40
codegen_flags: <defaults>
</compile_context>

<pallas_src>
import functools
import math

import jax
import jax.numpy as jnp
from jax.experimental import pallas as pl
from jax.experimental.pallas import tpu as pltpu


def _round_up(a, m):
    return ((a + m - 1) // m) * m


# ----------------------------------------------------------------------------
# Pallas kernel factory: whole PICNN forward for one batch tile.
# ----------------------------------------------------------------------------
def _make_picnn_kernel(num_layers):
    def kernel(x_ref, y_ref, *refs):
        out_ref = refs[-1]
        w_refs = refs[:-1]            # 4 refs per layer: W1, b1, W2, b2

        y = y_ref[...]                # (TB, y_dim) f32
        u = x_ref[...]                # (TB, x_dim) f32   (U_0 = X)
        z = y                         # Z_0 = Y
        y_dim = y.shape[-1]

        for k in range(num_layers):
            w1_ref, b1_ref, w2_ref, b2_ref = w_refs[4 * k: 4 * k + 4]
            z_in = z.shape[-1]

            # --- matmul 1: the three U-projections fused along N --------------
            #   cat1 = U @ [Wzu^T | Wyu^T | Lw^T] + [bz | by | Lb]
            w1 = w1_ref[...]
            cat1 = jnp.dot(u.astype(w1.dtype), w1,
                           preferred_element_type=jnp.float32) + b1_ref[...]
            gate_z = jnp.maximum(cat1[:, :z_in], 0.0)          # relu(Wzu u + bz)
            gate_y = cat1[:, z_in:z_in + y_dim]                #      Wyu u + by
            u_new = jnp.maximum(cat1[:, z_in + y_dim:], 0.0)   # relu(Lw  u + Lb)

            # --- matmul 2: Wz / Wy / Wu contributions fused along K -----------
            #   lhs2 = [Z*gate_z | Y*gate_y | U]   (uses the OLD U, as in PyTorch)
            lhs2 = jnp.concatenate([z * gate_z, y * gate_y, u], axis=-1)
            if w2_ref.shape[0] == 1:
                # z_out == 1: an N=1 matmul wastes a full MXU pass; do a VPU
                # multiply + lane reduce (weight pre-stored as a (1, K) row).
                acc = jnp.sum(lhs2 * w2_ref[...], axis=-1, keepdims=True)
            else:
                w2 = w2_ref[...]
                acc = jnp.dot(lhs2.astype(w2.dtype), w2,
                              preferred_element_type=jnp.float32)

            z = jnp.maximum(acc + b2_ref[...], 0.0)            # Z_{k+1}
            u = u_new                                          # U_{k+1}

        out_ref[...] = z.astype(out_ref.dtype)

    return kernel


# ----------------------------------------------------------------------------
# One-time parameter packing (hoisted out of the per-call path).
# ----------------------------------------------------------------------------
def prepare_picnn_params(layers, compute_dtype=jnp.bfloat16):
    """Pack PyTorch-layout PICNN parameters for the kernel (do this ONCE).

    Per layer:
      W1 = [Wzu^T | Wyu^T | Lw^T]   (u_in, z_in + y_dim + u_out)   compute_dtype
      b1 = [bz | by | Lb]           (1,  z_in + y_dim + u_out)     f32
      W2 = [Wz^T ; Wy^T ; Wu^T]     (z_in + y_dim + u_in, z_out)   compute_dtype
           (stored as a (1, K) f32 row when z_out == 1 -> VPU reduce path)
      b2 = bu                       (1, z_out)                     f32
    """
    x_dim = int(layers[0]["Wzu"].shape[1])
    y_dim = int(layers[0]["Wyu"].shape[0])
    out_dim = int(layers[-1]["Wu"].shape[0])

    arrays = []
    for p in layers:
        z_out = int(p["Wu"].shape[0])
        w1 = jnp.concatenate([p["Wzu"].T, p["Wyu"].T, p["Lw"].T], axis=1)
        b1 = jnp.concatenate([p["bz"], p["by"], p["Lb"]]).reshape(1, -1)
        w2 = jnp.concatenate([p["Wz"].T, p["Wy"].T, p["Wu"].T], axis=0)
        b2 = p["bu"].reshape(1, -1)
        if z_out == 1:
            w2 = w2.T.astype(jnp.float32)        # (1, K) row for the reduce path
        else:
            w2 = w2.astype(compute_dtype)
        arrays += [w1.astype(compute_dtype), b1.astype(jnp.float32),
                   w2, b2.astype(jnp.float32)]

    meta = dict(x_dim=x_dim, y_dim=y_dim, out_dim=out_dim, num_layers=len(layers))
    return tuple(arrays), meta


# ----------------------------------------------------------------------------
# Wrapper
# ----------------------------------------------------------------------------
def picnn_forward(x, y, packed_arrays, meta, *, batch_tile=256):
    x_dim, y_dim = meta["x_dim"], meta["y_dim"]
    out_dim, num_layers = meta["out_dim"], meta["num_layers"]

    x2 = x.reshape(-1, x_dim).astype(jnp.float32)
    y2 = y.reshape(-1, y_dim).astype(jnp.float32)
    n = x2.shape[0]
    assert y2.shape[0] == n, "X and Y must have the same batch size"

    # Batch tile: multiple of 8 sublanes; shrink so small batches still give
    # >= 2 grid steps (dimension_semantics=("parallel",) -> both v7x TCs used).
    bt = min(batch_tile, _round_up(n, 8))
    bt = max(8, _round_up(bt, 8))
    if bt >= n and n > 8:
        bt = max(8, _round_up(pl.cdiv(n, 2), 8))
    n_pad = _round_up(n, bt)
    if n_pad != n:
        x2 = jnp.pad(x2, ((0, n_pad - n), (0, 0)))
        y2 = jnp.pad(y2, ((0, n_pad - n), (0, 0)))
    grid = (n_pad // bt,)

    # Cost estimate + explicit VMEM budget (weights are tiny and are fetched
    # once as constant-index full-array blocks).
    flops = 0
    weight_bytes = 0
    for k in range(num_layers):
        w1, b1, w2, b2 = packed_arrays[4 * k: 4 * k + 4]
        flops += 2 * n_pad * w1.shape[0] * w1.shape[1]
        flops += 2 * n_pad * w2.shape[0] * w2.shape[1]
        weight_bytes += sum(int(a.size) * a.dtype.itemsize for a in (w1, b1, w2, b2))
    bytes_accessed = (int(x2.size) + int(y2.size) + n_pad * out_dim) * 4 + weight_bytes
    block_bytes = bt * (x_dim + y_dim + out_dim) * 4 + weight_bytes
    vmem_limit = int(min(64 * 1024 * 1024, max(32 * 1024 * 1024, 4 * block_bytes)))

    weight_specs = [pl.BlockSpec(a.shape, lambda i: (0, 0)) for a in packed_arrays]

    out = pl.pallas_call(
        _make_picnn_kernel(num_layers),
        out_shape=jax.ShapeDtypeStruct((n_pad, out_dim), jnp.float32),
        grid=grid,
        in_specs=[pl.BlockSpec((bt, x_dim), lambda i: (i, 0)),
                  pl.BlockSpec((bt, y_dim), lambda i: (i, 0))] + weight_specs,
        out_specs=pl.BlockSpec((bt, out_dim), lambda i: (i, 0)),
        compiler_params=pltpu.CompilerParams(
            dimension_semantics=("parallel",),
            vmem_limit_bytes=vmem_limit),
        cost_estimate=pl.CostEstimate(flops=flops, transcendentals=0,
                                      bytes_accessed=bytes_accessed),
    )(x2, y2, *packed_arrays)
    return out[:n]


# ----------------------------------------------------------------------------
# Deterministic parameter init mimicking the PyTorch modules:
#   kaiming_uniform(a=sqrt(5)) -> U(-1/sqrt(fan_in), 1/sqrt(fan_in));
#   weight_z clamped to >= 0 (convexity); biases ~ U(-1/sqrt(fan_in), .).
# ----------------------------------------------------------------------------
def init_picnn_params(key, x_dim=20, y_dim=20, u_dims=(100, 200, 300),
                      z_dims=(150, 250, 350), output_dim=1):
    u_full = [x_dim] + list(u_dims) + [output_dim]
    z_full = [y_dim] + list(z_dims) + [output_dim]

    def uni(k, shape, bound):
        return jax.random.uniform(k, shape, jnp.float32, -bound, bound)

    layers = []
    for k in range(len(u_full) - 1):
        u_in, u_out = u_full[k], u_full[k + 1]
        z_in, z_out = z_full[k], z_full[k + 1]
        key, *ks = jax.random.split(key, 11)
        bu_, by_, bz_ = 1 / math.sqrt(u_in), 1 / math.sqrt(y_dim), 1 / math.sqrt(z_in)
        layers.append(dict(
            Wzu=uni(ks[0], (z_in, u_in), bu_),   bz=uni(ks[1], (z_in,), bu_),
            Wyu=uni(ks[2], (y_dim, u_in), bu_),  by=uni(ks[3], (y_dim,), bu_),
            Wu=uni(ks[4], (z_out, u_in), bu_),   bu=uni(ks[5], (z_out,), bu_),
            Wy=uni(ks[6], (z_out, y_dim), by_),
            Wz=jnp.maximum(uni(ks[7], (z_out, z_in), bz_), 0.0),   # clamp_(0)
            Lw=uni(ks[8], (u_out, u_in), bu_),   Lb=uni(ks[9], (u_out,), bu_),
        ))
    return layers


# Pure-JAX, full-f32-precision mirror of the PyTorch forward (sanity check).
def picnn_reference(x, y, layers):
    mm = functools.partial(jnp.dot, precision=jax.lax.Precision.HIGHEST)
    x_dim = layers[0]["Wzu"].shape[1]
    y_dim = layers[0]["Wyu"].shape[0]
    x2 = x.reshape(-1, x_dim).astype(jnp.float32)
    y2 = y.reshape(-1, y_dim).astype(jnp.float32)
    u, z = x2, y2
    for p in layers:
        wzu = mm(u, p["Wzu"].T) + p["bz"]
        wyu = mm(u, p["Wyu"].T) + p["by"]
        wu = mm(u, p["Wu"].T) + p["bu"]
        wz = mm(z * jnp.maximum(wzu, 0.0), p["Wz"].T)
        wy = mm(y2 * wyu, p["Wy"].T)
        z_new = jnp.maximum(wz + wy + wu, 0.0)
        u = jnp.maximum(mm(u, p["Lw"].T) + p["Lb"], 0.0)   # old U, like PyTorch
        z = z_new
    return z


if __name__ == "__main__":
    # Small shapes consistent with the module (x_dim = y_dim = 20, scalar output).
    x_dim, y_dim, output_dim = 20, 20, 1
    u_dims, z_dims = [32, 64], [48, 80]
    batch = 64

    key = jax.random.PRNGKey(0)
    kx, ky, kp = jax.random.split(key, 3)
    X = jax.random.normal(kx, (batch, x_dim), jnp.float32)
    Y = jax.random.normal(ky, (batch, y_dim), jnp.float32)
    layers = init_picnn_params(kp, x_dim, y_dim, u_dims, z_dims, output_dim)

    ref = picnn_reference(X, Y, layers)

    # 1) f32 kernel: tight check of the fused-kernel logic.
    arrs32, meta32 = prepare_picnn_params(layers, compute_dtype=jnp.float32)
    fwd32 = jax.jit(lambda xx, yy, aa: picnn_forward(xx, yy, aa, meta32))
    out32 = jax.block_until_ready(fwd32(X, Y, arrs32))
    assert out32.shape == (batch, output_dim)
    assert jnp.allclose(out32, ref, rtol=1e-3, atol=1e-3), "f32 kernel mismatch"

    # 2) bf16 MXU inputs (default fast path): looser tolerance vs f32 reference.
    arrs16, meta16 = prepare_picnn_params(layers)            # bf16 weights
    fwd16 = jax.jit(lambda xx, yy, aa: picnn_forward(xx, yy, aa, meta16))
    out16 = jax.block_until_ready(fwd16(X, Y, arrs16))
    assert out16.shape == (batch, output_dim)
    assert jnp.allclose(out16, ref, rtol=5e-2, atol=5e-2), "bf16 kernel mismatch"

    print("KERNEL_OK")
</pallas_src>

<mosaic_0001>
module attributes {stable_mosaic.version = 11 : i64} {
  func.func @kernel(%arg0: i32, %arg1: memref<32x20xf32, #tpu.memory_space<vmem>>, %arg2: memref<32x20xf32, #tpu.memory_space<vmem>>, %arg3: memref<20x72xf32, #tpu.memory_space<vmem>>, %arg4: memref<1x72xf32, #tpu.memory_space<vmem>>, %arg5: memref<60x48xf32, #tpu.memory_space<vmem>>, %arg6: memref<1x48xf32, #tpu.memory_space<vmem>>, %arg7: memref<32x132xf32, #tpu.memory_space<vmem>>, %arg8: memref<1x132xf32, #tpu.memory_space<vmem>>, %arg9: memref<100x80xf32, #tpu.memory_space<vmem>>, %arg10: memref<1x80xf32, #tpu.memory_space<vmem>>, %arg11: memref<64x101xf32, #tpu.memory_space<vmem>>, %arg12: memref<1x101xf32, #tpu.memory_space<vmem>>, %arg13: memref<1x164xf32, #tpu.memory_space<vmem>>, %arg14: memref<1x1xf32, #tpu.memory_space<vmem>>, %arg15: memref<32x1xf32, #tpu.memory_space<vmem>>) attributes {dimension_semantics = [#tpu.dimension_semantics<parallel>], iteration_bounds = array<i64: 2>, scalar_prefetch = 0 : i64, scratch_operands = 0 : i64, tpu.core_type = #tpu.core_type<tc>, window_params = [{transform_indices = @transform_0, window_bounds = array<i64: 32, 20>}, {transform_indices = @transform_1, window_bounds = array<i64: 32, 20>}, {pipeline_mode = #tpu.pipeline_mode<synchronous>, transform_indices = @transform_2, window_bounds = array<i64: 20, 72>}, {pipeline_mode = #tpu.pipeline_mode<synchronous>, transform_indices = @transform_3, window_bounds = array<i64: 1, 72>}, {pipeline_mode = #tpu.pipeline_mode<synchronous>, transform_indices = @transform_4, window_bounds = array<i64: 60, 48>}, {pipeline_mode = #tpu.pipeline_mode<synchronous>, transform_indices = @transform_5, window_bounds = array<i64: 1, 48>}, {pipeline_mode = #tpu.pipeline_mode<synchronous>, transform_indices = @transform_6, window_bounds = array<i64: 32, 132>}, {pipeline_mode = #tpu.pipeline_mode<synchronous>, transform_indices = @transform_7, window_bounds = array<i64: 1, 132>}, {pipeline_mode = #tpu.pipeline_mode<synchronous>, transform_indices = @transform_8, window_bounds = array<i64: 100, 80>}, {pipeline_mode = #tpu.pipeline_mode<synchronous>, transform_indices = @transform_9, window_bounds = array<i64: 1, 80>}, {pipeline_mode = #tpu.pipeline_mode<synchronous>, transform_indices = @transform_10, window_bounds = array<i64: 64, 101>}, {pipeline_mode = #tpu.pipeline_mode<synchronous>, transform_indices = @transform_11, window_bounds = array<i64: 1, 101>}, {pipeline_mode = #tpu.pipeline_mode<synchronous>, transform_indices = @transform_12, window_bounds = array<i64: 1, 164>}, {pipeline_mode = #tpu.pipeline_mode<synchronous>, transform_indices = @transform_13, window_bounds = array<i64: 1, 1>}, {transform_indices = @transform_14, window_bounds = array<i64: 32, 1>}]} {
    %c0 = arith.constant 0 : index
    %c0_0 = arith.constant 0 : index
    %0 = vector.load %arg2[%c0, %c0_0] : memref<32x20xf32, #tpu.memory_space<vmem>>, vector<32x20xf32>
    %c0_1 = arith.constant 0 : index
    %c0_2 = arith.constant 0 : index
    %1 = vector.load %arg1[%c0_1, %c0_2] : memref<32x20xf32, #tpu.memory_space<vmem>>, vector<32x20xf32>
    %c0_3 = arith.constant 0 : index
    %c0_4 = arith.constant 0 : index
    %2 = vector.load %arg3[%c0_3, %c0_4] : memref<20x72xf32, #tpu.memory_space<vmem>>, vector<20x72xf32>
    %cst = arith.constant dense<0.000000e+00> : vector<32x72xf32>
    %3 = tpu.matmul %1, %2, %cst {dimension_numbers = #tpu.dot_dimension_numbers<[1], [0], [0], [1], [0, 0, 1, 1], [], []>} : vector<32x20xf32>, vector<20x72xf32>, vector<32x72xf32> -> vector<32x72xf32>
    %c0_5 = arith.constant 0 : index
    %c0_6 = arith.constant 0 : index
    %4 = vector.load %arg4[%c0_5, %c0_6] : memref<1x72xf32, #tpu.memory_space<vmem>>, vector<1x72xf32>
    %5 = vector.broadcast %4 : vector<1x72xf32> to vector<32x72xf32>
    %6 = arith.addf %3, %5 : vector<32x72xf32>
    %7 = vector.extract_strided_slice %6 {offsets = [0, 0], sizes = [32, 20], strides = [1, 1]} : vector<32x72xf32> to vector<32x20xf32>
    %cst_7 = arith.constant 0.000000e+00 : f32
    %8 = vector.broadcast %cst_7 : f32 to vector<32x20xf32>
    %9 = arith.maximumf %7, %8 : vector<32x20xf32>
    %10 = vector.extract_strided_slice %6 {offsets = [0, 20], sizes = [32, 20], strides = [1, 1]} : vector<32x72xf32> to vector<32x20xf32>
    %11 = vector.extract_strided_slice %6 {offsets = [0, 40], sizes = [32, 32], strides = [1, 1]} : vector<32x72xf32> to vector<32x32xf32>
    %cst_8 = arith.constant 0.000000e+00 : f32
    %12 = vector.broadcast %cst_8 : f32 to vector<32x32xf32>
    %13 = arith.maximumf %11, %12 : vector<32x32xf32>
    %14 = arith.mulf %0, %9 : vector<32x20xf32>
    %15 = arith.mulf %0, %10 : vector<32x20xf32>
    %16 = tpu.concatenate %14, %15, %1 in 1 : vector<32x20xf32>, vector<32x20xf32>, vector<32x20xf32> -> vector<32x60xf32>
    %c0_9 = arith.constant 0 : index
    %c0_10 = arith.constant 0 : index
    %17 = vector.load %arg5[%c0_9, %c0_10] : memref<60x48xf32, #tpu.memory_space<vmem>>, vector<60x48xf32>
    %cst_11 = arith.constant dense<0.000000e+00> : vector<32x48xf32>
    %18 = tpu.matmul %16, %17, %cst_11 {dimension_numbers = #tpu.dot_dimension_numbers<[1], [0], [0], [1], [0, 0, 1, 1], [], []>} : vector<32x60xf32>, vector<60x48xf32>, vector<32x48xf32> -> vector<32x48xf32>
    %c0_12 = arith.constant 0 : index
    %c0_13 = arith.constant 0 : index
    %19 = vector.load %arg6[%c0_12, %c0_13] : memref<1x48xf32, #tpu.memory_space<vmem>>, vector<1x48xf32>
    %20 = vector.broadcast %19 : vector<1x48xf32> to vector<32x48xf32>
    %21 = arith.addf %18, %20 : vector<32x48xf32>
    %cst_14 = arith.constant 0.000000e+00 : f32
    %22 = vector.broadcast %cst_14 : f32 to vector<32x48xf32>
    %23 = arith.maximumf %21, %22 : vector<32x48xf32>
    %c0_15 = arith.constant 0 : index
    %c0_16 = arith.constant 0 : index
    %24 = vector.load %arg7[%c0_15, %c0_16] : memref<32x132xf32, #tpu.memory_space<vmem>>, vector<32x132xf32>
    %cst_17 = arith.constant dense<0.000000e+00> : vector<32x132xf32>
    %25 = tpu.matmul %13, %24, %cst_17 {dimension_numbers = #tpu.dot_dimension_numbers<[1], [0], [0], [1], [0, 0, 1, 1], [], []>} : vector<32x32xf32>, vector<32x132xf32>, vector<32x132xf32> -> vector<32x132xf32>
    %c0_18 = arith.constant 0 : index
    %c0_19 = arith.constant 0 : index
    %26 = vector.load %arg8[%c0_18, %c0_19] : memref<1x132xf32, #tpu.memory_space<vmem>>, vector<1x132xf32>
    %27 = vector.broadcast %26 : vector<1x132xf32> to vector<32x132xf32>
    %28 = arith.addf %25, %27 : vector<32x132xf32>
    %29 = vector.extract_strided_slice %28 {offsets = [0, 0], sizes = [32, 48], strides = [1, 1]} : vector<32x132xf32> to vector<32x48xf32>
    %cst_20 = arith.constant 0.000000e+00 : f32
    %30 = vector.broadcast %cst_20 : f32 to vector<32x48xf32>
    %31 = arith.maximumf %29, %30 : vector<32x48xf32>
    %32 = vector.extract_strided_slice %28 {offsets = [0, 48], sizes = [32, 20], strides = [1, 1]} : vector<32x132xf32> to vector<32x20xf32>
    %33 = vector.extract_strided_slice %28 {offsets = [0, 68], sizes = [32, 64], strides = [1, 1]} : vector<32x132xf32> to vector<32x64xf32>
    %cst_21 = arith.constant 0.000000e+00 : f32
    %34 = vector.broadcast %cst_21 : f32 to vector<32x64xf32>
    %35 = arith.maximumf %33, %34 : vector<32x64xf32>
    %36 = arith.mulf %23, %31 : vector<32x48xf32>
    %37 = arith.mulf %0, %32 : vector<32x20xf32>
    %38 = tpu.concatenate %36, %37, %13 in 1 : vector<32x48xf32>, vector<32x20xf32>, vector<32x32xf32> -> vector<32x100xf32>
    %c0_22 = arith.constant 0 : index
    %c0_23 = arith.constant 0 : index
    %39 = vector.load %arg9[%c0_22, %c0_23] : memref<100x80xf32, #tpu.memory_space<vmem>>, vector<100x80xf32>
    %cst_24 = arith.constant dense<0.000000e+00> : vector<32x80xf32>
    %40 = tpu.matmul %38, %39, %cst_24 {dimension_numbers = #tpu.dot_dimension_numbers<[1], [0], [0], [1], [0, 0, 1, 1], [], []>} : vector<32x100xf32>, vector<100x80xf32>, vector<32x80xf32> -> vector<32x80xf32>
    %c0_25 = arith.constant 0 : index
    %c0_26 = arith.constant 0 : index
    %41 = vector.load %arg10[%c0_25, %c0_26] : memref<1x80xf32, #tpu.memory_space<vmem>>, vector<1x80xf32>
    %42 = vector.broadcast %41 : vector<1x80xf32> to vector<32x80xf32>
    %43 = arith.addf %40, %42 : vector<32x80xf32>
    %cst_27 = arith.constant 0.000000e+00 : f32
    %44 = vector.broadcast %cst_27 : f32 to vector<32x80xf32>
    %45 = arith.maximumf %43, %44 : vector<32x80xf32>
    %c0_28 = arith.constant 0 : index
    %c0_29 = arith.constant 0 : index
    %46 = vector.load %arg11[%c0_28, %c0_29] : memref<64x101xf32, #tpu.memory_space<vmem>>, vector<64x101xf32>
    %cst_30 = arith.constant dense<0.000000e+00> : vector<32x101xf32>
    %47 = tpu.matmul %35, %46, %cst_30 {dimension_numbers = #tpu.dot_dimension_numbers<[1], [0], [0], [1], [0, 0, 1, 1], [], []>} : vector<32x64xf32>, vector<64x101xf32>, vector<32x101xf32> -> vector<32x101xf32>
    %c0_31 = arith.constant 0 : index
    %c0_32 = arith.constant 0 : index
    %48 = vector.load %arg12[%c0_31, %c0_32] : memref<1x101xf32, #tpu.memory_space<vmem>>, vector<1x101xf32>
    %49 = vector.broadcast %48 : vector<1x101xf32> to vector<32x101xf32>
    %50 = arith.addf %47, %49 : vector<32x101xf32>
    %51 = vector.extract_strided_slice %50 {offsets = [0, 0], sizes = [32, 80], strides = [1, 1]} : vector<32x101xf32> to vector<32x80xf32>
    %cst_33 = arith.constant 0.000000e+00 : f32
    %52 = vector.broadcast %cst_33 : f32 to vector<32x80xf32>
    %53 = arith.maximumf %51, %52 : vector<32x80xf32>
    %54 = vector.extract_strided_slice %50 {offsets = [0, 80], sizes = [32, 20], strides = [1, 1]} : vector<32x101xf32> to vector<32x20xf32>
    %55 = arith.mulf %45, %53 : vector<32x80xf32>
    %56 = arith.mulf %0, %54 : vector<32x20xf32>
    %57 = tpu.concatenate %55, %56, %35 in 1 : vector<32x80xf32>, vector<32x20xf32>, vector<32x64xf32> -> vector<32x164xf32>
    %c0_34 = arith.constant 0 : index
    %c0_35 = arith.constant 0 : index
    %58 = vector.load %arg13[%c0_34, %c0_35] : memref<1x164xf32, #tpu.memory_space<vmem>>, vector<1x164xf32>
    %59 = vector.broadcast %58 : vector<1x164xf32> to vector<32x164xf32>
    %60 = arith.mulf %57, %59 : vector<32x164xf32>
    %cst_36 = arith.constant dense<0.000000e+00> : vector<32xf32>
    %61 = vector.multi_reduction <add>, %60, %cst_36 [1] : vector<32x164xf32> to vector<32xf32>
    %62 = vector.shape_cast %61 : vector<32xf32> to vector<32x1xf32>
    %c0_37 = arith.constant 0 : index
    %c0_38 = arith.constant 0 : index
    %63 = vector.load %arg14[%c0_37, %c0_38] : memref<1x1xf32, #tpu.memory_space<vmem>>, vector<1x1xf32>
    %64 = vector.broadcast %63 : vector<1x1xf32> to vector<32x1xf32>
    %65 = arith.addf %62, %64 : vector<32x1xf32>
    %cst_39 = arith.constant 0.000000e+00 : f32
    %66 = vector.broadcast %cst_39 : f32 to vector<32x1xf32>
    %67 = arith.maximumf %65, %66 : vector<32x1xf32>
    %c0_40 = arith.constant 0 : index
    %c0_41 = arith.constant 0 : index
    %68 = vector.load %arg15[%c0_40, %c0_41] : memref<32x1xf32, #tpu.memory_space<vmem>>, vector<32x1xf32>
    tpu.vector_store %arg15[%c0_40, %c0_41], %67 {strides = array<i32>} : memref<32x1xf32, #tpu.memory_space<vmem>>, vector<32x1xf32>,
    return
  }
  func.func @transform_0(%arg0: i32) -> (i32, i32) {
    %c0_i32 = arith.constant 0 : i32
    %c0_i32_0 = arith.constant 0 : i32
    return %arg0, %c0_i32 : i32, i32
  }
  func.func @transform_1(%arg0: i32) -> (i32, i32) {
    %c0_i32 = arith.constant 0 : i32
    %c0_i32_0 = arith.constant 0 : i32
    return %arg0, %c0_i32 : i32, i32
  }
  func.func @transform_2(%arg0: i32) -> (i32, i32) {
    %c0_i32 = arith.constant 0 : i32
    %c0_i32_0 = arith.constant 0 : i32
    %c0_i32_1 = arith.constant 0 : i32
    return %c0_i32, %c0_i32_0 : i32, i32
  }
  func.func @transform_3(%arg0: i32) -> (i32, i32) {
    %c0_i32 = arith.constant 0 : i32
    %c0_i32_0 = arith.constant 0 : i32
    %c0_i32_1 = arith.constant 0 : i32
    return %c0_i32, %c0_i32_0 : i32, i32
  }
  func.func @transform_4(%arg0: i32) -> (i32, i32) {
    %c0_i32 = arith.constant 0 : i32
    %c0_i32_0 = arith.constant 0 : i32
    %c0_i32_1 = arith.constant 0 : i32
    return %c0_i32, %c0_i32_0 : i32, i32
  }
  func.func @transform_5(%arg0: i32) -> (i32, i32) {
    %c0_i32 = arith.constant 0 : i32
    %c0_i32_0 = arith.constant 0 : i32
    %c0_i32_1 = arith.constant 0 : i32
    return %c0_i32, %c0_i32_0 : i32, i32
  }
  func.func @transform_6(%arg0: i32) -> (i32, i32) {
    %c0_i32 = arith.constant 0 : i32
    %c0_i32_0 = arith.constant 0 : i32
    %c0_i32_1 = arith.constant 0 : i32
    return %c0_i32, %c0_i32_0 : i32, i32
  }
  func.func @transform_7(%arg0: i32) -> (i32, i32) {
    %c0_i32 = arith.constant 0 : i32
    %c0_i32_0 = arith.constant 0 : i32
    %c0_i32_1 = arith.constant 0 : i32
    return %c0_i32, %c0_i32_0 : i32, i32
  }
  func.func @transform_8(%arg0: i32) -> (i32, i32) {
    %c0_i32 = arith.constant 0 : i32
    %c0_i32_0 = arith.constant 0 : i32
    %c0_i32_1 = arith.constant 0 : i32
    return %c0_i32, %c0_i32_0 : i32, i32
  }
  func.func @transform_9(%arg0: i32) -> (i32, i32) {
    %c0_i32 = arith.constant 0 : i32
    %c0_i32_0 = arith.constant 0 : i32
    %c0_i32_1 = arith.constant 0 : i32
    return %c0_i32, %c0_i32_0 : i32, i32
  }
  func.func @transform_10(%arg0: i32) -> (i32, i32) {
    %c0_i32 = arith.constant 0 : i32
    %c0_i32_0 = arith.constant 0 : i32
    %c0_i32_1 = arith.constant 0 : i32
    return %c0_i32, %c0_i32_0 : i32, i32
  }
  func.func @transform_11(%arg0: i32) -> (i32, i32) {
    %c0_i32 = arith.constant 0 : i32
    %c0_i32_0 = arith.constant 0 : i32
    %c0_i32_1 = arith.constant 0 : i32
    return %c0_i32, %c0_i32_0 : i32, i32
  }
  func.func @transform_12(%arg0: i32) -> (i32, i32) {
    %c0_i32 = arith.constant 0 : i32
    %c0_i32_0 = arith.constant 0 : i32
    %c0_i32_1 = arith.constant 0 : i32
    return %c0_i32, %c0_i32_0 : i32, i32
  }
  func.func @transform_13(%arg0: i32) -> (i32, i32) {
    %c0_i32 = arith.constant 0 : i32
    %c0_i32_0 = arith.constant 0 : i32
    %c0_i32_1 = arith.constant 0 : i32
    return %c0_i32, %c0_i32_0 : i32, i32
  }
  func.func @transform_14(%arg0: i32) -> (i32, i32) {
    %c0_i32 = arith.constant 0 : i32
    %c0_i32_0 = arith.constant 0 : i32
    return %arg0, %c0_i32 : i32, i32
  }
}

</mosaic_0001>

<llo_original>
// kernel: _lambda_.1
$region0: #{_lambda_.1}
  #allocation0 [shape = 'u32[]', space=smem, size = 0x4, offset = 0x4, fixed_abs, tag = 'smem constant byte address 0x4 - core index']
  #allocation1 [shape = 'u32[72,128]{1,0:T(1,128)}', space=vmem, size = 0x9000, scoped, tag = 'internal scratch']
  #allocation2 [shape = 'f32[1,1]{1,0:T(1,128)S(1)}', space=vmem, size = 0x200, scoped, tag = 'scoped memory for _lambda_.1']
  %s0 = inlined_call_operand.vmem [shape: f32[64,20], index: 0, kind: input, shape index: {}]
  %s1 = inlined_call_operand.vmem [shape: f32[64,20], index: 1, kind: input, shape index: {}]
  %s2 = inlined_call_operand.vmem [shape: f32[20,72], index: 2, kind: input, shape index: {}]
  %s3 = inlined_call_operand.vmem [shape: f32[1,72], index: 3, kind: input, shape index: {}]
  %s4 = inlined_call_operand.vmem [shape: f32[60,48], index: 4, kind: input, shape index: {}]
  %s5 = inlined_call_operand.vmem [shape: f32[1,48], index: 5, kind: input, shape index: {}]
  %s6 = inlined_call_operand.vmem [shape: f32[32,132], index: 6, kind: input, shape index: {}]
  %s7 = inlined_call_operand.vmem [shape: f32[1,132], index: 7, kind: input, shape index: {}]
  %s8 = inlined_call_operand.vmem [shape: f32[100,80], index: 8, kind: input, shape index: {}]
  %s9 = inlined_call_operand.vmem [shape: f32[1,80], index: 9, kind: input, shape index: {}]
  %s10 = inlined_call_operand.vmem [shape: f32[64,101], index: 10, kind: input, shape index: {}]
  %s11 = inlined_call_operand.vmem [shape: f32[1,101], index: 11, kind: input, shape index: {}]
  %s12 = inlined_call_operand.vmem [shape: f32[1,164], index: 12, kind: input, shape index: {}]
  %s13 = inlined_call_operand.<no memory space> [shape: f32[1,1], index: 13, kind: input, shape index: {}]
  %s14 = inlined_call_operand.vmem [shape: f32[64,1], index: 14, kind: output, shape index: {}]
  %s15 = sld [smem:[#allocation0]]
  $region89: #{_lambda_.1} parent=0
    _
  %s17 = ssub.s32 1, %s15
  %s18 = scalar_select 0, %s17, %s15
  %v19 = vstv %s13
  %20 = vst [vmem:[#allocation2] sm:$0x1] %v19
  loop: start=0, step=1, limit=4
  $region2: #{_lambda_.1} parent=0 // loop_pre_header
    _
  $region3: #{_lambda_.1} parent=0 // loop_header
    %s22 = sphi 0, %s26
    %p23 = scmp.ge.s32.totalorder %s22, 4
    %s32 = sphi 0, %s34
    %s35 = sphi 0, %s32
    %s36 = sphi 0, %s35
    %s52 = sphi 0, %s36
    %s58 = sphi 0, %s60
    %s61 = sphi 0, %s58
    %s62 = sphi 0, %s61
    %s78 = sphi 0, %s62
    %s82 = sphi 0, %s82
    %s84 = sphi 0, %s82
    %s85 = sphi 0, %s84
    %s99 = sphi 0, %s85
    %s103 = sphi 0, %s103
    %s105 = sphi 0, %s103
    %s106 = sphi 0, %s105
    %s120 = sphi 0, %s106
    %s124 = sphi 0, %s124
    %s126 = sphi 0, %s124
    %s127 = sphi 0, %s126
    %s141 = sphi 0, %s127
    %s145 = sphi 0, %s145
    %s147 = sphi 0, %s145
    %s148 = sphi 0, %s147
    %s162 = sphi 0, %s148
    %s166 = sphi 0, %s166
    %s168 = sphi 0, %s166
    %s169 = sphi 0, %s168
    %s183 = sphi 0, %s169
    %s187 = sphi 0, %s187
    %s189 = sphi 0, %s187
    %s190 = sphi 0, %s189
    %s204 = sphi 0, %s190
    %s208 = sphi 0, %s208
    %s210 = sphi 0, %s208
    %s211 = sphi 0, %s210
    %s225 = sphi 0, %s211
    %s229 = sphi 0, %s229
    %s231 = sphi 0, %s229
    %s232 = sphi 0, %s231
    %s246 = sphi 0, %s232
    %s250 = sphi 0, %s250
    %s252 = sphi 0, %s250
    %s253 = sphi 0, %s252
    %s267 = sphi 0, %s253
    %s271 = sphi 0, %s271
    %s273 = sphi 0, %s271
    %s274 = sphi 0, %s273
    %s288 = sphi 0, %s274
    %s292 = sphi 0, %s292
    %s294 = sphi 0, %s292
    %s295 = sphi 0, %s294
    %s309 = sphi 0, %s295
    %s313 = sphi 0, %s313
    %s315 = sphi 0, %s313
    %s316 = sphi 0, %s315
    %s330 = sphi 0, %s316
    %s336 = sphi 0, %s338
    %s339 = sphi 0, %s336
    %s340 = sphi 0, %s339
    %s356 = sphi 0, %s340
  $region4: #{_lambda_.1} parent=0 // loop_header_branch
    %25 = sbr.rel (%p23) target = $region8
  $region5: #{_lambda_.1} parent=0 // loop_body
    %s27 = ssub.s32 %s22, 1
    %s28 = ssub.s32 %s22, 2
    %s29 = sadd.s32 %s22, 1
    %s30 = ssub.s32 %s22, %s29
    %p31 = scmp.eq.s32.totalorder %s30, 0
    %s33 = sadd.s32 %s32, 1
    %s34 = scalar_select %p31, %s32, %s33
    %p37 = pneg %p31
    %p38 = scmp.eq.s32.totalorder %s22, 1
    %p39 = por %p37, %p38
    %p40 = scmp.ne.s32.totalorder %s32, %s35
    %p41 = scmp.eq.s32.totalorder %s22, 0
    %p42 = por %p40, %p41
    %p43 = scmp.ne.s32.totalorder %s32, %s35
    %p44 = scmp.eq.s32.totalorder %s27, 1
    %p45 = por %p43, %p44
    %p46 = scmp.ne.s32.totalorder %s35, %s36
    %p47 = scmp.eq.s32.totalorder %s27, 0
    %p48 = por %p46, %p47
    %p49 = scmp.ne.s32.totalorder %s35, %s36
    %p50 = scmp.eq.s32.totalorder %s28, 1
    %p51 = por %p49, %p50
    %p53 = scmp.ne.s32.totalorder %s36, %s52
    %p54 = scmp.eq.s32.totalorder %s28, 0
    %p55 = por %p53, %p54
    %s56 = ssub.s32 %s22, %s29
    %p57 = scmp.eq.s32.totalorder %s56, 0
    %s59 = sadd.s32 %s58, 1
    %s60 = scalar_select %p57, %s58, %s59
    %p63 = pneg %p57
    %p64 = scmp.eq.s32.totalorder %s22, 1
    %p65 = por %p63, %p64
    %p66 = scmp.ne.s32.totalorder %s58, %s61
    %p67 = scmp.eq.s32.totalorder %s22, 0
    %p68 = por %p66, %p67
    %p69 = scmp.ne.s32.totalorder %s58, %s61
    %p70 = scmp.eq.s32.totalorder %s27, 1
    %p71 = por %p69, %p70
    %p72 = scmp.ne.s32.totalorder %s61, %s62
    %p73 = scmp.eq.s32.totalorder %s27, 0
    %p74 = por %p72, %p73
    %p75 = scmp.ne.s32.totalorder %s61, %s62
    %p76 = scmp.eq.s32.totalorder %s28, 1
    %p77 = por %p75, %p76
    %p79 = scmp.ne.s32.totalorder %s62, %s78
    %p80 = scmp.eq.s32.totalorder %s28, 0
    %p81 = por %p79, %p80
    %s83 = sadd.s32 %s82, 1
    %p86 = scmp.eq.s32.totalorder %s22, 1
    %p87 = scmp.ne.s32.totalorder %s82, %s84
    %p88 = scmp.eq.s32.totalorder %s22, 0
    %p89 = por %p87, %p88
    %p90 = scmp.ne.s32.totalorder %s82, %s84
    %p91 = scmp.eq.s32.totalorder %s27, 1
    %p92 = por %p90, %p91
    %p93 = scmp.ne.s32.totalorder %s84, %s85
    %p94 = scmp.eq.s32.totalorder %s27, 0
    %p95 = por %p93, %p94
    %p96 = scmp.ne.s32.totalorder %s84, %s85
    %p97 = scmp.eq.s32.totalorder %s28, 1
    %p98 = por %p96, %p97
    %p100 = scmp.ne.s32.totalorder %s85, %s99
    %p101 = scmp.eq.s32.totalorder %s28, 0
    %p102 = por %p100, %p101
    %s104 = sadd.s32 %s103, 1
    %p107 = scmp.eq.s32.totalorder %s22, 1
    %p108 = scmp.ne.s32.totalorder %s103, %s105
    %p109 = scmp.eq.s32.totalorder %s22, 0
    %p110 = por %p108, %p109
    %p111 = scmp.ne.s32.totalorder %s103, %s105
    %p112 = scmp.eq.s32.totalorder %s27, 1
    %p113 = por %p111, %p112
    %p114 = scmp.ne.s32.totalorder %s105, %s106
    %p115 = scmp.eq.s32.totalorder %s27, 0
    %p116 = por %p114, %p115
    %p117 = scmp.ne.s32.totalorder %s105, %s106
    %p118 = scmp.eq.s32.totalorder %s28, 1
    %p119 = por %p117, %p118
    %p121 = scmp.ne.s32.totalorder %s106, %s120
    %p122 = scmp.eq.s32.totalorder %s28, 0
    %p123 = por %p121, %p122
    %s125 = sadd.s32 %s124, 1
    %p128 = scmp.eq.s32.totalorder %s22, 1
    %p129 = scmp.ne.s32.totalorder %s124, %s126
    %p130 = scmp.eq.s32.totalorder %s22, 0
    %p131 = por %p129, %p130
    %p132 = scmp.ne.s32.totalorder %s124, %s126
    %p133 = scmp.eq.s32.totalorder %s27, 1
    %p134 = por %p132, %p133
    %p135 = scmp.ne.s32.totalorder %s126, %s127
    %p136 = scmp.eq.s32.totalorder %s27, 0
    %p137 = por %p135, %p136
    %p138 = scmp.ne.s32.totalorder %s126, %s127
    %p139 = scmp.eq.s32.totalorder %s28, 1
    %p140 = por %p138, %p139
    %p142 = scmp.ne.s32.totalorder %s127, %s141
    %p143 = scmp.eq.s32.totalorder %s28, 0
    %p144 = por %p142, %p143
    %s146 = sadd.s32 %s145, 1
    %p149 = scmp.eq.s32.totalorder %s22, 1
    %p150 = scmp.ne.s32.totalorder %s145, %s147
    %p151 = scmp.eq.s32.totalorder %s22, 0
    %p152 = por %p150, %p151
    %p153 = scmp.ne.s32.totalorder %s145, %s147
    %p154 = scmp.eq.s32.totalorder %s27, 1
    %p155 = por %p153, %p154
    %p156 = scmp.ne.s32.totalorder %s147, %s148
    %p157 = scmp.eq.s32.totalorder %s27, 0
    %p158 = por %p156, %p157
    %p159 = scmp.ne.s32.totalorder %s147, %s148
    %p160 = scmp.eq.s32.totalorder %s28, 1
    %p161 = por %p159, %p160
    %p163 = scmp.ne.s32.totalorder %s148, %s162
    %p164 = scmp.eq.s32.totalorder %s28, 0
    %p165 = por %p163, %p164
    %s167 = sadd.s32 %s166, 1
    %p170 = scmp.eq.s32.totalorder %s22, 1
    %p171 = scmp.ne.s32.totalorder %s166, %s168
    %p172 = scmp.eq.s32.totalorder %s22, 0
    %p173 = por %p171, %p172
    %p174 = scmp.ne.s32.totalorder %s166, %s168
    %p175 = scmp.eq.s32.totalorder %s27, 1
    %p176 = por %p174, %p175
    %p177 = scmp.ne.s32.totalorder %s168, %s169
    %p178 = scmp.eq.s32.totalorder %s27, 0
    %p179 = por %p177, %p178
    %p180 = scmp.ne.s32.totalorder %s168, %s169
    %p181 = scmp.eq.s32.totalorder %s28, 1
    %p182 = por %p180, %p181
    %p184 = scmp.ne.s32.totalorder %s169, %s183
    %p185 = scmp.eq.s32.totalorder %s28, 0
    %p186 = por %p184, %p185
    %s188 = sadd.s32 %s187, 1
    %p191 = scmp.eq.s32.totalorder %s22, 1
    %p192 = scmp.ne.s32.totalorder %s187, %s189
    %p193 = scmp.eq.s32.totalorder %s22, 0
    %p194 = por %p192, %p193
    %p195 = scmp.ne.s32.totalorder %s187, %s189
    %p196 = scmp.eq.s32.totalorder %s27, 1
    %p197 = por %p195, %p196
    %p198 = scmp.ne.s32.totalorder %s189, %s190
    %p199 = scmp.eq.s32.totalorder %s27, 0
    %p200 = por %p198, %p199
    %p201 = scmp.ne.s32.totalorder %s189, %s190
    %p202 = scmp.eq.s32.totalorder %s28, 1
    %p203 = por %p201, %p202
    %p205 = scmp.ne.s32.totalorder %s190, %s204
    %p206 = scmp.eq.s32.totalorder %s28, 0
    %p207 = por %p205, %p206
    %s209 = sadd.s32 %s208, 1
    %p212 = scmp.eq.s32.totalorder %s22, 1
    %p213 = scmp.ne.s32.totalorder %s208, %s210
    %p214 = scmp.eq.s32.totalorder %s22, 0
    %p215 = por %p213, %p214
    %p216 = scmp.ne.s32.totalorder %s208, %s210
    %p217 = scmp.eq.s32.totalorder %s27, 1
    %p218 = por %p216, %p217
    %p219 = scmp.ne.s32.totalorder %s210, %s211
    %p220 = scmp.eq.s32.totalorder %s27, 0
    %p221 = por %p219, %p220
    %p222 = scmp.ne.s32.totalorder %s210, %s211
    %p223 = scmp.eq.s32.totalorder %s28, 1
    %p224 = por %p222, %p223
    %p226 = scmp.ne.s32.totalorder %s211, %s225
    %p227 = scmp.eq.s32.totalorder %s28, 0
    %p228 = por %p226, %p227
    %s230 = sadd.s32 %s229, 1
    %p233 = scmp.eq.s32.totalorder %s22, 1
    %p234 = scmp.ne.s32.totalorder %s229, %s231
    %p235 = scmp.eq.s32.totalorder %s22, 0
    %p236 = por %p234, %p235
    %p237 = scmp.ne.s32.totalorder %s229, %s231
    %p238 = scmp.eq.s32.totalorder %s27, 1
    %p239 = por %p237, %p238
    %p240 = scmp.ne.s32.totalorder %s231, %s232
    %p241 = scmp.eq.s32.totalorder %s27, 0
    %p242 = por %p240, %p241
    %p243 = scmp.ne.s32.totalorder %s231, %s232
    %p244 = scmp.eq.s32.totalorder %s28, 1
    %p245 = por %p243, %p244
    %p247 = scmp.ne.s32.totalorder %s232, %s246
    %p248 = scmp.eq.s32.totalorder %s28, 0
    %p249 = por %p247, %p248
    %s251 = sadd.s32 %s250, 1
    %p254 = scmp.eq.s32.totalorder %s22, 1
    %p255 = scmp.ne.s32.totalorder %s250, %s252
    %p256 = scmp.eq.s32.totalorder %s22, 0
    %p257 = por %p255, %p256
    %p258 = scmp.ne.s32.totalorder %s250, %s252
    %p259 = scmp.eq.s32.totalorder %s27, 1
    %p260 = por %p258, %p259
    %p261 = scmp.ne.s32.totalorder %s252, %s253
    %p262 = scmp.eq.s32.totalorder %s27, 0
    %p263 = por %p261, %p262
    %p264 = scmp.ne.s32.totalorder %s252, %s253
    %p265 = scmp.eq.s32.totalorder %s28, 1
    %p266 = por %p264, %p265
    %p268 = scmp.ne.s32.totalorder %s253, %s267
    %p269 = scmp.eq.s32.totalorder %s28, 0
    %p270 = por %p268, %p269
    %s272 = sadd.s32 %s271, 1
    %p275 = scmp.eq.s32.totalorder %s22, 1
    %p276 = scmp.ne.s32.totalorder %s271, %s273
    %p277 = scmp.eq.s32.totalorder %s22, 0
    %p278 = por %p276, %p277
    %p279 = scmp.ne.s32.totalorder %s271, %s273
    %p280 = scmp.eq.s32.totalorder %s27, 1
    %p281 = por %p279, %p280
    %p282 = scmp.ne.s32.totalorder %s273, %s274
    %p283 = scmp.eq.s32.totalorder %s27, 0
    %p284 = por %p282, %p283
    %p285 = scmp.ne.s32.totalorder %s273, %s274
    %p286 = scmp.eq.s32.totalorder %s28, 1
    %p287 = por %p285, %p286
    %p289 = scmp.ne.s32.totalorder %s274, %s288
    %p290 = scmp.eq.s32.totalorder %s28, 0
    %p291 = por %p289, %p290
    %s293 = sadd.s32 %s292, 1
    %p296 = scmp.eq.s32.totalorder %s22, 1
    %p297 = scmp.ne.s32.totalorder %s292, %s294
    %p298 = scmp.eq.s32.totalorder %s22, 0
    %p299 = por %p297, %p298
    %p300 = scmp.ne.s32.totalorder %s292, %s294
    %p301 = scmp.eq.s32.totalorder %s27, 1
    %p302 = por %p300, %p301
    %p303 = scmp.ne.s32.totalorder %s294, %s295
    %p304 = scmp.eq.s32.totalorder %s27, 0
    %p305 = por %p303, %p304
    %p306 = scmp.ne.s32.totalorder %s294, %s295
    %p307 = scmp.eq.s32.totalorder %s28, 1
    %p308 = por %p306, %p307
    %p310 = scmp.ne.s32.totalorder %s295, %s309
    %p311 = scmp.eq.s32.totalorder %s28, 0
    %p312 = por %p310, %p311
    %s314 = sadd.s32 %s313, 1
    %p317 = scmp.eq.s32.totalorder %s22, 1
    %p318 = scmp.ne.s32.totalorder %s313, %s315
    %p319 = scmp.eq.s32.totalorder %s22, 0
    %p320 = por %p318, %p319
    %p321 = scmp.ne.s32.totalorder %s313, %s315
    %p322 = scmp.eq.s32.totalorder %s27, 1
    %p323 = por %p321, %p322
    %p324 = scmp.ne.s32.totalorder %s315, %s316
    %p325 = scmp.eq.s32.totalorder %s27, 0
    %p326 = por %p324, %p325
    %p327 = scmp.ne.s32.totalorder %s315, %s316
    %p328 = scmp.eq.s32.totalorder %s28, 1
    %p329 = por %p327, %p328
    %p331 = scmp.ne.s32.totalorder %s316, %s330
    %p332 = scmp.eq.s32.totalorder %s28, 0
    %p333 = por %p331, %p332
    %s334 = ssub.s32 %s22, %s29
    %p335 = scmp.eq.s32.totalorder %s334, 0
    %s337 = sadd.s32 %s336, 1
    %s338 = scalar_select %p335, %s336, %s337
    %p341 = pneg %p335
    %p342 = scmp.eq.s32.totalorder %s22, 1
    %p343 = por %p341, %p342
    %p344 = scmp.ne.s32.totalorder %s336, %s339
    %p345 = scmp.eq.s32.totalorder %s22, 0
    %p346 = por %p344, %p345
    %p347 = scmp.ne.s32.totalorder %s336, %s339
    %p348 = scmp.eq.s32.totalorder %s27, 1
    %p349 = por %p347, %p348
    %p350 = scmp.ne.s32.totalorder %s339, %s340
    %p351 = scmp.eq.s32.totalorder %s27, 0
    %p352 = por %p350, %p351
    %p353 = scmp.ne.s32.totalorder %s339, %s340
    %p354 = scmp.eq.s32.totalorder %s28, 1
    %p355 = por %p353, %p354
    %p357 = scmp.ne.s32.totalorder %s340, %s356
    %p358 = scmp.eq.s32.totalorder %s28, 0
    %p359 = por %p357, %p358
    %p360 = scmp.le.s32.totalorder 1, %s22
    %p361 = scmp.lt.s32.totalorder %s22, 3
    %p362 = pnand %p360, %p361
    %p363 = pneg %p362
    // Predicated region
    $region9: #{_lambda_.1} parent=5 // pred_check
      _
    $region10: #{_lambda_.1} parent=5 // pred_check_branch
      %365 = sbr.rel (%p362) target = $region12
    $region11: #{_lambda_.1} parent=5 // pred_region
      %s366 = ssub.s32 %s22, 1
      // Predicated region
      $region13: #{_lambda_.1} parent=11 // pred_check
        %p367 = pneg %p95
      $region14: #{_lambda_.1} parent=11 // pred_check_branch
        %369 = sbr.rel (%p367) target = $region16
      $region15: #{_lambda_.1} parent=11 // pred_region
        _
      $region16: #{_lambda_.1} parent=11 // pred_fallthru
        _
      // Predicated region
      $region17: #{_lambda_.1} parent=11 // pred_check
        %p370 = pneg %p116
      $region18: #{_lambda_.1} parent=11 // pred_check_branch
        %372 = sbr.rel (%p370) target = $region20
      $region19: #{_lambda_.1} parent=11 // pred_region
        _
      $region20: #{_lambda_.1} parent=11 // pred_fallthru
        _
      // Predicated region
      $region21: #{_lambda_.1} parent=11 // pred_check
        %p373 = pneg %p137
      $region22: #{_lambda_.1} parent=11 // pred_check_branch
        %375 = sbr.rel (%p373) target = $region24
      $region23: #{_lambda_.1} parent=11 // pred_region
        _
      $region24: #{_lambda_.1} parent=11 // pred_fallthru
        _
      // Predicated region
      $region25: #{_lambda_.1} parent=11 // pred_check
        %p376 = pneg %p158
      $region26: #{_lambda_.1} parent=11 // pred_check_branch
        %378 = sbr.rel (%p376) target = $region28
      $region27: #{_lambda_.1} parent=11 // pred_region
        _
      $region28: #{_lambda_.1} parent=11 // pred_fallthru
        _
      // Predicated region
      $region29: #{_lambda_.1} parent=11 // pred_check
        %p379 = pneg %p179
      $region30: #{_lambda_.1} parent=11 // pred_check_branch
        %381 = sbr.rel (%p379) target = $region32
      $region31: #{_lambda_.1} parent=11 // pred_region
        _
      $region32: #{_lambda_.1} parent=11 // pred_fallthru
        _
      // Predicated region
      $region33: #{_lambda_.1} parent=11 // pred_check
        %p382 = pneg %p200
      $region34: #{_lambda_.1} parent=11 // pred_check_branch
        %384 = sbr.rel (%p382) target = $region36
      $region35: #{_lambda_.1} parent=11 // pred_region
        _
      $region36: #{_lambda_.1} parent=11 // pred_fallthru
        _
      // Predicated region
      $region37: #{_lambda_.1} parent=11 // pred_check
        %p385 = pneg %p221
      $region38: #{_lambda_.1} parent=11 // pred_check_branch
        %387 = sbr.rel (%p385) target = $region40
      $region39: #{_lambda_.1} parent=11 // pred_region
        _
      $region40: #{_lambda_.1} parent=11 // pred_fallthru
        _
      // Predicated region
      $region41: #{_lambda_.1} parent=11 // pred_check
        %p388 = pneg %p242
      $region42: #{_lambda_.1} parent=11 // pred_check_branch
        %390 = sbr.rel (%p388) target = $region44
      $region43: #{_lambda_.1} parent=11 // pred_region
        _
      $region44: #{_lambda_.1} parent=11 // pred_fallthru
        _
      // Predicated region
      $region45: #{_lambda_.1} parent=11 // pred_check
        %p391 = pneg %p263
      $region46: #{_lambda_.1} parent=11 // pred_check_branch
        %393 = sbr.rel (%p391) target = $region48
      $region47: #{_lambda_.1} parent=11 // pred_region
        _
      $region48: #{_lambda_.1} parent=11 // pred_fallthru
        _
      // Predicated region
      $region49: #{_lambda_.1} parent=11 // pred_check
        %p394 = pneg %p284
      $region50: #{_lambda_.1} parent=11 // pred_check_branch
        %396 = sbr.rel (%p394) target = $region52
      $region51: #{_lambda_.1} parent=11 // pred_region
        _
      $region52: #{_lambda_.1} parent=11 // pred_fallthru
        _
      // Predicated region
      $region53: #{_lambda_.1} parent=11 // pred_check
        %p397 = pneg %p305
      $region54: #{_lambda_.1} parent=11 // pred_check_branch
        %399 = sbr.rel (%p397) target = $region56
      $region55: #{_lambda_.1} parent=11 // pred_region
        _
      $region56: #{_lambda_.1} parent=11 // pred_fallthru
        _
      // Predicated region
      $region57: #{_lambda_.1} parent=11 // pred_check
        %p400 = pneg %p326
      $region58: #{_lambda_.1} parent=11 // pred_check_branch
        %402 = sbr.rel (%p400) target = $region60
      $region59: #{_lambda_.1} parent=11 // pred_region
        _
      $region60: #{_lambda_.1} parent=11 // pred_fallthru
        _
    $region12: #{_lambda_.1} parent=5 // pred_fallthru
      _
    %p403 = scmp.lt.s32.totalorder %s22, 2
    // Predicated region
    $region61: #{_lambda_.1} parent=5 // pred_check
      %p404 = pneg %p403
    $region62: #{_lambda_.1} parent=5 // pred_check_branch
      %406 = sbr.rel (%p404) target = $region64
    $region63: #{_lambda_.1} parent=5 // pred_region
      // Predicated region
      $region65: #{_lambda_.1} parent=63 // pred_check
        %p407 = pneg %p42
      $region66: #{_lambda_.1} parent=63 // pred_check_branch
        %409 = sbr.rel (%p407) target = $region68
      $region67: #{_lambda_.1} parent=63 // pred_region
        %s410 = smul.u32 4, %s22
        %p411 = scmp.lt.s32.totalorder %s410, 7
        %s412 = scalar_select %p411, %s410, 7
        %s413 = smul.addr %s412, 8
        %s414 = scalar_lea.vmem %s0, %s413
        %s415 = smul.u32 4, %s22
      $region68: #{_lambda_.1} parent=63 // pred_fallthru
        _
      // Predicated region
      $region69: #{_lambda_.1} parent=63 // pred_check
        %p416 = pneg %p68
      $region70: #{_lambda_.1} parent=63 // pred_check_branch
        %418 = sbr.rel (%p416) target = $region72
      $region71: #{_lambda_.1} parent=63 // pred_region
        %s419 = smul.u32 4, %s22
        %p420 = scmp.lt.s32.totalorder %s419, 7
        %s421 = scalar_select %p420, %s419, 7
        %s422 = smul.addr %s421, 8
        %s423 = scalar_lea.vmem %s1, %s422
        %s424 = smul.u32 4, %s22
      $region72: #{_lambda_.1} parent=63 // pred_fallthru
        _
    $region64: #{_lambda_.1} parent=5 // pred_fallthru
      _
    %p425 = scmp.le.s32.totalorder 1, %s22
    %p426 = scmp.lt.s32.totalorder %s22, 3
    %p427 = pnand %p425, %p426
    %p428 = pneg %p427
    // Predicated region
    $region73: #{_lambda_.1} parent=5 // pred_check
      _
    $region74: #{_lambda_.1} parent=5 // pred_check_branch
      %430 = sbr.rel (%p427) target = $region76
    $region75: #{_lambda_.1} parent=5 // pred_region
      %s431 = ssub.s32 %s22, 1
      %s432 = smul.u32 4, %s27
      %p433 = scmp.lt.s32.totalorder %s432, 7
      %s434 = scalar_select %p433, %s432, 7
      %s435 = smul.addr %s434, 8
      %s436 = scalar_lea.vmem %s0, %s435
      %p437 = pneg %p48
      %p438 = pneg %p45
      %s439 = smul.u32 4, %s27
      %p440 = scmp.lt.s32.totalorder %s439, 7
      %s441 = scalar_select %p440, %s439, 7
      %s442 = smul.addr %s441, 8
      %s443 = scalar_lea.vmem %s1, %s442
      %p444 = pneg %p74
      %p445 = pneg %p71
      %p446 = pneg %p95
      %p447 = pneg %p92
      %p448 = pneg %p116
      %p449 = pneg %p113
      %p450 = pneg %p137
      %p451 = pneg %p134
      %p452 = pneg %p158
      %p453 = pneg %p155
      %p454 = pneg %p179
      %p455 = pneg %p176
      %p456 = pneg %p200
      %p457 = pneg %p197
      %p458 = pneg %p221
      %p459 = pneg %p218
      %p460 = pneg %p242
      %p461 = pneg %p239
      %p462 = pneg %p263
      %p463 = pneg %p260
      %p464 = pneg %p284
      %p465 = pneg %p281
      %p466 = pneg %p305
      %p467 = pneg %p302
      %p468 = pneg %p326
      %p469 = pneg %p323
      %p470 = pneg %p352
      %p471 = pneg %p349
      %s472 = smul.u32 4, %s27
      %p473 = scmp.lt.s32.totalorder %s472, 7
      %s474 = scalar_select %p473, %s472, 7
      %s475 = smul.addr %s474, 8
      %s476 = scalar_lea.vmem %s14, %s475
      %s477 = smul.u32 4, %s27
      %p478 = scmp.lt.s32.totalorder %s477, 7
      %s479 = scalar_select %p478, %s477, 7
      %s480 = smul.addr %s479, 8
      %s481 = scalar_lea.vmem %s0, %s480
      %s482 = smul.u32 4, %s27
      %s483 = smul.u32 4, %s27
      %p484 = scmp.lt.s32.totalorder %s483, 7
      %s485 = scalar_select %p484, %s483, 7
      %s486 = smul.addr %s485, 8
      %s487 = scalar_lea.vmem %s1, %s486
      %s488 = smul.u32 4, %s27
      %s489 = smul.u32 4, %s27
      %p490 = scmp.lt.s32.totalorder %s489, 7
      %s491 = scalar_select %p490, %s489, 7
      %s492 = smul.addr %s491, 8
      %s493 = scalar_lea.vmem %s14, %s492
      %s494 = smul.u32 4, %s27
      %v495 = vld [vmem:[%s487] sm:$0xff]
      %v496 = vld [vmem:[%s487 + $0x8] sm:$0xff]
      %v497 = vld [vmem:[%s487 + $0x10] sm:$0xff]
      %v498 = vld [vmem:[%s487 + $0x18] sm:$0xff]
      %v499 = vld [vmem:[%s481] sm:$0xff]
      %v500 = vld [vmem:[%s481 + $0x8] sm:$0xff]
      %v501 = vld [vmem:[%s481 + $0x10] sm:$0xff]
      %v502 = vld [vmem:[%s481 + $0x18] sm:$0xff]
      %v503 = vld [vmem:[%s2] sm:$0xff]
      %v504 = vld [vmem:[%s2 + $0x8] sm:$0xff]
      %v505 = vld [vmem:[%s2 + $0x10] sm:$0xf]
      %v506 = vld [vmem:[%s3] sm:$0x1]
      %v508 = vperm.slane %v506, 0
      %vm510 = vcmask 162816
      %v512 = vsel %vm510, %v499, 0
      %v515 = vsel %vm510, %v500, 0
      %v518 = vsel %vm510, %v501, 0
      %v521 = vsel %vm510, %v502, 0
      %vm523 = vcmask 1043456
      %v525 = vsel %vm523, %v505, 0
      %527 = vmatpush.msra.mxu0 0.0
      %528 = vmatpush.msra.mxu0 0.0
      %529 = vmatpush.msra.mxu0 0.0
      %530 = vmatpush.msra.mxu0 0.0
      %531 = vmatpush.msra.mxu0 0.0
      %532 = vmatpush.msra.mxu0 0.0
      %533 = vmatpush.msra.mxu0 0.0
      %534 = vmatpush.msra.mxu0 0.0
      %535 = vmatpush.msra.mxu0 0.0
      %536 = vmatpush.msra.mxu0 0.0
      %537 = vmatpush.msra.mxu0 0.0
      %538 = vmatpush.msra.mxu0 0.0
      %539 = vmatpush.msra.mxu0 0.0
      %540 = vmatpush.msra.mxu0 %v525
      %541 = vmatpush.msra.mxu0 %v504
      %542 = vmatpush.msra.mxu0 %v503
      %543 = vmatmul.f32.gmra.mxu0 %v512
      %v544 = vpop.f32.mrf.mxu0
      %v545 = vadd.f32 %v508, %v544
      %546 = vmatmul.f32.gmra.mxu0 %v515
      %v547 = vpop.f32.mrf.mxu0
      %v548 = vadd.f32 %v508, %v547
      %549 = vmatmul.f32.gmra.mxu0 %v518
      %v550 = vpop.f32.mrf.mxu0
      %v551 = vadd.f32 %v508, %v550
      %552 = vmatmul.f32.gmra.mxu0 %v521
      %v553 = vpop.f32.mrf.mxu0
      %v554 = vadd.f32 %v508, %v553
      %555 = vdwg.mxu0
      %v556 = vmax.f32 %v545, 0.0
      %v557 = vmax.f32 %v548, 0.0
      %v558 = vmax.f32 %v551, 0.0
      %v559 = vmax.f32 %v554, 0.0
      %v560 = vmul.f32 %v495, %v556
      %v561 = vmul.f32 %v496, %v557
      %v562 = vmul.f32 %v497, %v558
      %v563 = vmul.f32 %v498, %v559
      %568 = vrot.lane.b32.xlu0 %v545, 108
      %v569 = vpop.permute.xlu0 %568
      %570 = vrot.lane.b32.xlu0 %v548, 108
      %v571 = vpop.permute.xlu0 %570
      %572 = vrot.lane.b32.xlu0 %v551, 108
      %v573 = vpop.permute.xlu0 %572
      %574 = vrot.lane.b32.xlu0 %v554, 108
      %v575 = vpop.permute.xlu0 %574
      %v580 = vmul.f32 %v495, %v569
      %v581 = vmul.f32 %v496, %v571
      %v582 = vmul.f32 %v497, %v573
      %v583 = vmul.f32 %v498, %v575
      %588 = vrot.lane.b32.xlu0 %v580, 20
      %v589 = vpop.permute.xlu0 %588
      %590 = vrot.lane.b32.xlu0 %v581, 20
      %v591 = vpop.permute.xlu0 %590
      %592 = vrot.lane.b32.xlu0 %v582, 20
      %v593 = vpop.permute.xlu0 %592
      %594 = vrot.lane.b32.xlu0 %v583, 20
      %v595 = vpop.permute.xlu0 %594
      %600 = vrot.lane.b32.xlu0 %v499, 40
      %v601 = vpop.permute.xlu0 %600
      %602 = vrot.lane.b32.xlu0 %v500, 40
      %v603 = vpop.permute.xlu0 %602
      %604 = vrot.lane.b32.xlu0 %v501, 40
      %v605 = vpop.permute.xlu0 %604
      %606 = vrot.lane.b32.xlu0 %v502, 40
      %v607 = vpop.permute.xlu0 %606
      %v612 = vsel %vm510, %v560, %v589
      %v613 = vsel %vm510, %v561, %v591
      %v614 = vsel %vm510, %v562, %v593
      %v615 = vsel %vm510, %v563, %v595
      %vm616 = vcmask 326656
      %v617 = vsel %vm616, %v612, %v601
      %v618 = vsel %vm616, %v613, %v603
      %v619 = vsel %vm616, %v614, %v605
      %v620 = vsel %vm616, %v615, %v607
      %v621 = vld [vmem:[%s4] sm:$0xff]
      %v622 = vld [vmem:[%s4 + $0x8] sm:$0xff]
      %v623 = vld [vmem:[%s4 + $0x10] sm:$0xff]
      %v624 = vld [vmem:[%s4 + $0x18] sm:$0xff]
      %v625 = vld [vmem:[%s4 + $0x20] sm:$0xff]
      %v626 = vld [vmem:[%s4 + $0x28] sm:$0xff]
      %v627 = vld [vmem:[%s4 + $0x30] sm:$0xff]
      %v628 = vld [vmem:[%s4 + $0x38] sm:$0xf]
      %v629 = vld [vmem:[%s5] sm:$0x1]
      %v631 = vperm.slane %v629, 0
      %vm633 = vcmask 490496
      %v635 = vsel %vm633, %v617, 0
      %v638 = vsel %vm633, %v618, 0
      %v641 = vsel %vm633, %v619, 0
      %v644 = vsel %vm633, %v620, 0
      %v647 = vsel %vm523, %v628, 0
      %649 = vmatpush.msra.mxu0 0.0
      %650 = vmatpush.msra.mxu0 0.0
      %651 = vmatpush.msra.mxu0 0.0
      %652 = vmatpush.msra.mxu0 0.0
      %653 = vmatpush.msra.mxu0 0.0
      %654 = vmatpush.msra.mxu0 0.0
      %655 = vmatpush.msra.mxu0 0.0
      %656 = vmatpush.msra.mxu0 0.0
      %657 = vmatpush.msra.mxu0 %v647
      %658 = vmatpush.msra.mxu0 %v627
      %659 = vmatpush.msra.mxu0 %v626
      %660 = vmatpush.msra.mxu0 %v625
      %661 = vmatpush.msra.mxu0 %v624
      %662 = vmatpush.msra.mxu0 %v623
      %663 = vmatpush.msra.mxu0 %v622
      %664 = vmatpush.msra.mxu0 %v621
      %665 = vmatmul.f32.gmra.mxu0 %v635
      %v666 = vpop.f32.mrf.mxu0
      %v667 = vadd.f32 %v631, %v666
      %668 = vmatmul.f32.gmra.mxu0 %v638
      %v669 = vpop.f32.mrf.mxu0
      %v670 = vadd.f32 %v631, %v669
      %671 = vmatmul.f32.gmra.mxu0 %v641
      %v672 = vpop.f32.mrf.mxu0
      %v673 = vadd.f32 %v631, %v672
      %674 = vmatmul.f32.gmra.mxu0 %v644
      %v675 = vpop.f32.mrf.mxu0
      %v676 = vadd.f32 %v631, %v675
      %677 = vdwg.mxu0
      %v678 = vmax.f32 %v667, 0.0
      %v679 = vmax.f32 %v670, 0.0
      %v680 = vmax.f32 %v673, 0.0
      %v681 = vmax.f32 %v676, 0.0
      %v682 = vld [vmem:[%s6] sm:$0xff]
      %v683 = vld [vmem:[%s6 + $0x8] sm:$0xff]
      %v684 = vld [vmem:[%s6 + $0x10] sm:$0xff]
      %v685 = vld [vmem:[%s6 + $0x18] sm:$0xff]
      %v686 = vld [vmem:[%s6 + $0x20] sm:$0xff]
      %v687 = vld [vmem:[%s6 + $0x28] sm:$0xff]
      %v688 = vld [vmem:[%s6 + $0x30] sm:$0xff]
      %v689 = vld [vmem:[%s6 + $0x38] sm:$0xff]
      %v690 = vld [vmem:[%s7] sm:$0x3]
      %v692 = vperm.slane %v690, 0
      %v693 = vperm.slane %v690, 1
      %700 = vrot.lane.b32.xlu0 %v556, 88
      %v701 = vpop.permute.xlu0 %700
      %702 = vrot.lane.b32.xlu0 %v557, 88
      %v703 = vpop.permute.xlu0 %702
      %704 = vrot.lane.b32.xlu0 %v558, 88
      %v705 = vpop.permute.xlu0 %704
      %706 = vrot.lane.b32.xlu0 %v559, 88
      %v707 = vpop.permute.xlu0 %706
      %vm708 = vcmask 261120
      %v709 = vsel %vm708, %v701, 0
      %v711 = vsel %vm708, %v703, 0
      %v713 = vsel %vm708, %v705, 0
      %v715 = vsel %vm708, %v707, 0
      %717 = vmatpush.msra.mxu0 0.0
      %718 = vmatpush.msra.mxu0 0.0
      %719 = vmatpush.msra.mxu0 0.0
      %720 = vmatpush.msra.mxu0 0.0
      %721 = vmatpush.msra.mxu0 0.0
      %722 = vmatpush.msra.mxu0 0.0
      %723 = vmatpush.msra.mxu0 0.0
      %724 = vmatpush.msra.mxu0 0.0
      %725 = vmatpush.msra.mxu0 0.0
      %726 = vmatpush.msra.mxu0 0.0
      %727 = vmatpush.msra.mxu0 0.0
      %728 = vmatpush.msra.mxu0 0.0
      %729 = vmatpush.msra.mxu0 %v688
      %730 = vmatpush.msra.mxu0 %v686
      %731 = vmatpush.msra.mxu0 %v684
      %732 = vmatpush.msra.mxu0 %v682
      %733 = vmatmul.f32.gmra.mxu0 %v709
      %v734 = vpop.f32.mrf.mxu0
      %v735 = vadd.f32 %v692, %v734
      %736 = vmatmul.f32.gmra.mxu0 %v711
      %v737 = vpop.f32.mrf.mxu0
      %v738 = vadd.f32 %v692, %v737
      %739 = vmatmul.f32.gmra.mxu0 %v713
      %v740 = vpop.f32.mrf.mxu0
      %v741 = vadd.f32 %v692, %v740
      %742 = vmatmul.f32.gmra.mxu0 %v715
      %v743 = vpop.f32.mrf.mxu0
      %v744 = vadd.f32 %v692, %v743
      %745 = vdwg.mxu0
      %746 = vmatpush.msra.mxu0 0.0
      %747 = vmatpush.msra.mxu0 0.0
      %748 = vmatpush.msra.mxu0 0.0
      %749 = vmatpush.msra.mxu0 0.0
      %750 = vmatpush.msra.mxu0 0.0
      %751 = vmatpush.msra.mxu0 0.0
      %752 = vmatpush.msra.mxu0 0.0
      %753 = vmatpush.msra.mxu0 0.0
      %754 = vmatpush.msra.mxu0 0.0
      %755 = vmatpush.msra.mxu0 0.0
      %756 = vmatpush.msra.mxu0 0.0
      %757 = vmatpush.msra.mxu0 0.0
      %758 = vmatpush.msra.mxu0 %v689
      %759 = vmatpush.msra.mxu0 %v687
      %760 = vmatpush.msra.mxu0 %v685
      %761 = vmatpush.msra.mxu0 %v683
      %762 = vmatmul.f32.gmra.mxu0 %v709
      %v763 = vpop.f32.mrf.mxu0
      %v764 = vadd.f32 %v693, %v763
      %765 = vmatmul.f32.gmra.mxu0 %v711
      %v766 = vpop.f32.mrf.mxu0
      %v767 = vadd.f32 %v693, %v766
      %768 = vmatmul.f32.gmra.mxu0 %v713
      %v769 = vpop.f32.mrf.mxu0
      %v770 = vadd.f32 %v693, %v769
      %771 = vmatmul.f32.gmra.mxu0 %v715
      %v772 = vpop.f32.mrf.mxu0
      %v773 = vadd.f32 %v693, %v772
      %774 = vdwg.mxu0
      %v775 = vmax.f32 %v735, 0.0
      %v776 = vmax.f32 %v738, 0.0
      %v777 = vmax.f32 %v741, 0.0
      %v778 = vmax.f32 %v744, 0.0
      %v779 = vmax.f32 %v764, 0.0
      %v780 = vmax.f32 %v767, 0.0
      %v781 = vmax.f32 %v770, 0.0
      %v782 = vmax.f32 %v773, 0.0
      %v783 = vmul.f32 %v678, %v775
      %v784 = vmul.f32 %v679, %v776
      %v785 = vmul.f32 %v680, %v777
      %v786 = vmul.f32 %v681, %v778
      %791 = vrot.lane.b32.xlu0 %v735, 80
      %v792 = vpop.permute.xlu0 %791
      %793 = vrot.lane.b32.xlu0 %v738, 80
      %v794 = vpop.permute.xlu0 %793
      %795 = vrot.lane.b32.xlu0 %v741, 80
      %v796 = vpop.permute.xlu0 %795
      %797 = vrot.lane.b32.xlu0 %v744, 80
      %v798 = vpop.permute.xlu0 %797
      %v803 = vmul.f32 %v495, %v792
      %v804 = vmul.f32 %v496, %v794
      %v805 = vmul.f32 %v497, %v796
      %v806 = vmul.f32 %v498, %v798
      %811 = vrot.lane.b32.xlu0 %v803, 48
      %v812 = vpop.permute.xlu0 %811
      %813 = vrot.lane.b32.xlu0 %v804, 48
      %v814 = vpop.permute.xlu0 %813
      %815 = vrot.lane.b32.xlu0 %v805, 48
      %v816 = vpop.permute.xlu0 %815
      %817 = vrot.lane.b32.xlu0 %v806, 48
      %v818 = vpop.permute.xlu0 %817
      %823 = vrot.lane.b32.xlu0 %v556, 28
      %v824 = vpop.permute.xlu0 %823
      %825 = vrot.lane.b32.xlu0 %v557, 28
      %v826 = vpop.permute.xlu0 %825
      %827 = vrot.lane.b32.xlu0 %v558, 28
      %v828 = vpop.permute.xlu0 %827
      %829 = vrot.lane.b32.xlu0 %v559, 28
      %v830 = vpop.permute.xlu0 %829
      %vm835 = vcmask 392192
      %v836 = vsel %vm835, %v783, %v812
      %v837 = vsel %vm835, %v784, %v814
      %v838 = vsel %vm835, %v785, %v816
      %v839 = vsel %vm835, %v786, %v818
      %vm840 = vcmask 556032
      %v841 = vsel %vm840, %v836, %v824
      %v842 = vsel %vm840, %v837, %v826
      %v843 = vsel %vm840, %v838, %v828
      %v844 = vsel %vm840, %v839, %v830
      %v845 = vld [vmem:[%s8] sm:$0xff]
      %v846 = vld [vmem:[%s8 + $0x8] sm:$0xff]
      %v847 = vld [vmem:[%s8 + $0x10] sm:$0xff]
      %v848 = vld [vmem:[%s8 + $0x18] sm:$0xff]
      %v849 = vld [vmem:[%s8 + $0x20] sm:$0xff]
      %v850 = vld [vmem:[%s8 + $0x28] sm:$0xff]
      %v851 = vld [vmem:[%s8 + $0x30] sm:$0xff]
      %v852 = vld [vmem:[%s8 + $0x38] sm:$0xff]
      %v853 = vld [vmem:[%s8 + $0x40] sm:$0xff]
      %v854 = vld [vmem:[%s8 + $0x48] sm:$0xff]
      %v855 = vld [vmem:[%s8 + $0x50] sm:$0xff]
      %v856 = vld [vmem:[%s8 + $0x58] sm:$0xff]
      %v857 = vld [vmem:[%s8 + $0x60] sm:$0xf]
      %v858 = vld [vmem:[%s9] sm:$0x1]
      %v860 = vperm.slane %v858, 0
      %vm862 = vcmask 818176
      %v864 = vsel %vm862, %v841, 0
      %v867 = vsel %vm862, %v842, 0
      %v870 = vsel %vm862, %v843, 0
      %v873 = vsel %vm862, %v844, 0
      %v876 = vsel %vm523, %v857, 0
      %878 = vmatpush.msra.mxu0 0.0
      %879 = vmatpush.msra.mxu0 0.0
      %880 = vmatpush.msra.mxu0 0.0
      %881 = vmatpush.msra.mxu0 %v876
      %882 = vmatpush.msra.mxu0 %v856
      %883 = vmatpush.msra.mxu0 %v855
      %884 = vmatpush.msra.mxu0 %v854
      %885 = vmatpush.msra.mxu0 %v853
      %886 = vmatpush.msra.mxu0 %v852
      %887 = vmatpush.msra.mxu0 %v851
      %888 = vmatpush.msra.mxu0 %v850
      %889 = vmatpush.msra.mxu0 %v849
      %890 = vmatpush.msra.mxu0 %v848
      %891 = vmatpush.msra.mxu0 %v847
      %892 = vmatpush.msra.mxu0 %v846
      %893 = vmatpush.msra.mxu0 %v845
      %894 = vmatmul.f32.gmra.mxu0 %v864
      %v895 = vpop.f32.mrf.mxu0
      %v896 = vadd.f32 %v860, %v895
      %897 = vmatmul.f32.gmra.mxu0 %v867
      %v898 = vpop.f32.mrf.mxu0
      %v899 = vadd.f32 %v860, %v898
      %900 = vmatmul.f32.gmra.mxu0 %v870
      %v901 = vpop.f32.mrf.mxu0
      %v902 = vadd.f32 %v860, %v901
      %903 = vmatmul.f32.gmra.mxu0 %v873
      %v904 = vpop.f32.mrf.mxu0
      %v905 = vadd.f32 %v860, %v904
      %906 = vdwg.mxu0
      %v907 = vmax.f32 %v896, 0.0
      %v908 = vmax.f32 %v899, 0.0
      %v909 = vmax.f32 %v902, 0.0
      %v910 = vmax.f32 %v905, 0.0
      %v911 = vld [vmem:[%s10] sm:$0xff]
      %v912 = vld [vmem:[%s10 + $0x8] sm:$0xff]
      %v913 = vld [vmem:[%s10 + $0x10] sm:$0xff]
      %v914 = vld [vmem:[%s10 + $0x18] sm:$0xff]
      %v915 = vld [vmem:[%s10 + $0x20] sm:$0xff]
      %v916 = vld [vmem:[%s10 + $0x28] sm:$0xff]
      %v917 = vld [vmem:[%s10 + $0x30] sm:$0xff]
      %v918 = vld [vmem:[%s10 + $0x38] sm:$0xff]
      %v919 = vld [vmem:[%s11] sm:$0x1]
      %v921 = vperm.slane %v919, 0
      %931 = vrot.lane.b32.xlu0 %v775, 60
      %v932 = vpop.permute.xlu0 %931
      %933 = vrot.lane.b32.xlu0 %v779, 60
      %v934 = vpop.permute.xlu0 %933
      %935 = vrot.lane.b32.xlu0 %v776, 60
      %v936 = vpop.permute.xlu0 %935
      %937 = vrot.lane.b32.xlu0 %v780, 60
      %v938 = vpop.permute.xlu0 %937
      %939 = vrot.lane.b32.xlu0 %v777, 60
      %v940 = vpop.permute.xlu0 %939
      %941 = vrot.lane.b32.xlu0 %v781, 60
      %v942 = vpop.permute.xlu0 %941
      %943 = vrot.lane.b32.xlu0 %v778, 60
      %v944 = vpop.permute.xlu0 %943
      %945 = vrot.lane.b32.xlu0 %v782, 60
      %v946 = vpop.permute.xlu0 %945
      %v947 = vsel %vm633, %v932, %v934
      %v948 = vsel %vm633, %v936, %v938
      %v949 = vsel %vm633, %v940, %v942
      %v950 = vsel %vm633, %v944, %v946
      %vm951 = vcmask 523264
      %v952 = vsel %vm951, %v947, 0
      %v954 = vsel %vm951, %v948, 0
      %v956 = vsel %vm951, %v949, 0
      %v958 = vsel %vm951, %v950, 0
      %960 = vmatpush.msra.mxu0 0.0
      %961 = vmatpush.msra.mxu0 0.0
      %962 = vmatpush.msra.mxu0 0.0
      %963 = vmatpush.msra.mxu0 0.0
      %964 = vmatpush.msra.mxu0 0.0
      %965 = vmatpush.msra.mxu0 0.0
      %966 = vmatpush.msra.mxu0 0.0
      %967 = vmatpush.msra.mxu0 0.0
      %968 = vmatpush.msra.mxu0 %v918
      %969 = vmatpush.msra.mxu0 %v917
      %970 = vmatpush.msra.mxu0 %v916
      %971 = vmatpush.msra.mxu0 %v915
      %972 = vmatpush.msra.mxu0 %v914
      %973 = vmatpush.msra.mxu0 %v913
      %974 = vmatpush.msra.mxu0 %v912
      %975 = vmatpush.msra.mxu0 %v911
      %976 = vmatmul.f32.gmra.mxu0 %v952
      %v977 = vpop.f32.mrf.mxu0
      %v978 = vadd.f32 %v921, %v977
      %979 = vmatmul.f32.gmra.mxu0 %v954
      %v980 = vpop.f32.mrf.mxu0
      %v981 = vadd.f32 %v921, %v980
      %982 = vmatmul.f32.gmra.mxu0 %v956
      %v983 = vpop.f32.mrf.mxu0
      %v984 = vadd.f32 %v921, %v983
      %985 = vmatmul.f32.gmra.mxu0 %v958
      %v986 = vpop.f32.mrf.mxu0
      %v987 = vadd.f32 %v921, %v986
      %988 = vdwg.mxu0
      %v989 = vmax.f32 %v978, 0.0
      %v990 = vmax.f32 %v981, 0.0
      %v991 = vmax.f32 %v984, 0.0
      %v992 = vmax.f32 %v987, 0.0
      %v993 = vmul.f32 %v907, %v989
      %v994 = vmul.f32 %v908, %v990
      %v995 = vmul.f32 %v909, %v991
      %v996 = vmul.f32 %v910, %v992
      %1001 = vrot.lane.b32.xlu0 %v978, 48
      %v1002 = vpop.permute.xlu0 %1001
      %1003 = vrot.lane.b32.xlu0 %v981, 48
      %v1004 = vpop.permute.xlu0 %1003
      %1005 = vrot.lane.b32.xlu0 %v984, 48
      %v1006 = vpop.permute.xlu0 %1005
      %1007 = vrot.lane.b32.xlu0 %v987, 48
      %v1008 = vpop.permute.xlu0 %1007
      %v1013 = vmul.f32 %v495, %v1002
      %v1014 = vmul.f32 %v496, %v1004
      %v1015 = vmul.f32 %v497, %v1006
      %v1016 = vmul.f32 %v498, %v1008
      %1021 = vrot.lane.b32.xlu0 %v1013, 80
      %v1022 = vpop.permute.xlu0 %1021
      %1023 = vrot.lane.b32.xlu0 %v1014, 80
      %v1024 = vpop.permute.xlu0 %1023
      %1025 = vrot.lane.b32.xlu0 %v1015, 80
      %v1026 = vpop.permute.xlu0 %1025
      %1027 = vrot.lane.b32.xlu0 %v1016, 80
      %v1028 = vpop.permute.xlu0 %1027
      %1033 = vrot.lane.b32.xlu0 %v775, 32
      %v1034 = vpop.permute.xlu0 %1033
      %1035 = vrot.lane.b32.xlu0 %v779, 32
      %v1036 = vpop.permute.xlu0 %1035
      %1037 = vrot.lane.b32.xlu0 %v776, 32
      %v1038 = vpop.permute.xlu0 %1037
      %1039 = vrot.lane.b32.xlu0 %v780, 32
      %v1040 = vpop.permute.xlu0 %1039
      %1041 = vrot.lane.b32.xlu0 %v777, 32
      %v1042 = vpop.permute.xlu0 %1041
      %1043 = vrot.lane.b32.xlu0 %v781, 32
      %v1044 = vpop.permute.xlu0 %1043
      %1045 = vrot.lane.b32.xlu0 %v778, 32
      %v1046 = vpop.permute.xlu0 %1045
      %1047 = vrot.lane.b32.xlu0 %v782, 32
      %v1048 = vpop.permute.xlu0 %1047
      %v1049 = vsel %vm708, %v1034, %v1036
      %v1050 = vsel %vm708, %v1038, %v1040
      %v1051 = vsel %vm708, %v1042, %v1044
      %v1052 = vsel %vm708, %v1046, %v1048
      %vm1061 = vcmask 654336
      %v1062 = vsel %vm1061, %v993, %v1022
      %v1063 = vsel %vm1061, %v994, %v1024
      %v1064 = vsel %vm1061, %v995, %v1026
      %v1065 = vsel %vm1061, %v996, %v1028
      %v1066 = vsel %vm862, %v1062, %v1034
      %v1067 = vsel %vm862, %v1063, %v1038
      %v1068 = vsel %vm862, %v1064, %v1042
      %v1069 = vsel %vm862, %v1065, %v1046
      %v1070 = vld [vmem:[%s12] sm:$0x3]
      %v1072 = vperm.slane %v1070, 0
      %v1073 = vperm.slane %v1070, 1
      %v1076 = vmul.f32 %v1066, %v1072
      %v1077 = vmul.f32 %v1049, %v1073
      %v1078 = vmul.f32 %v1067, %v1072
      %v1079 = vmul.f32 %v1050, %v1073
      %v1080 = vmul.f32 %v1068, %v1072
      %v1081 = vmul.f32 %v1051, %v1073
      %v1082 = vmul.f32 %v1069, %v1072
      %v1083 = vmul.f32 %v1052, %v1073
      %vm1084 = vcmask 293888
      %v1085 = vsel %vm1084, %v1077, 0.0
      %v1086 = vadd.f32 %v1076, %v1085
      %1087 = vadd.xlane.f32.xlu0 %v1086
      %v1088 = vpop.xlane.xlu0 %1087
      %v1089 = vsel %vm1084, %v1079, 0.0
      %v1090 = vadd.f32 %v1078, %v1089
      %1091 = vadd.xlane.f32.xlu0 %v1090
      %v1092 = vpop.xlane.xlu0 %1091
      %v1093 = vsel %vm1084, %v1081, 0.0
      %v1094 = vadd.f32 %v1080, %v1093
      %1095 = vadd.xlane.f32.xlu0 %v1094
      %v1096 = vpop.xlane.xlu0 %1095
      %v1097 = vsel %vm1084, %v1083, 0.0
      %v1098 = vadd.f32 %v1082, %v1097
      %1099 = vadd.xlane.f32.xlu0 %v1098
      %v1100 = vpop.xlane.xlu0 %1099
      %v1101 = vld [vmem:[#allocation2] sm:$0x1]
      %v1103 = vperm.slane %v1101, 0
      %v1105 = vadd.f32 %v1088, %v1103
      %v1106 = vadd.f32 %v1092, %v1103
      %v1107 = vadd.f32 %v1096, %v1103
      %v1108 = vadd.f32 %v1100, %v1103
      %v1109 = vmax.f32 %v1105, 0.0
      %v1110 = vmax.f32 %v1106, 0.0
      %v1111 = vmax.f32 %v1107, 0.0
      %v1112 = vmax.f32 %v1108, 0.0
      %vm1113 = vcmask 7168
      %1114 = vst.msk [vmem:[%s493] sm:$0xff] %vm1113, %v1109
      %1115 = vst.msk [vmem:[%s493 + $0x8] sm:$0xff] %vm1113, %v1110
      %1116 = vst.msk [vmem:[%s493 + $0x10] sm:$0xff] %vm1113, %v1111
      %1117 = vst.msk [vmem:[%s493 + $0x18] sm:$0xff] %vm1113, %v1112
      %s1118 = smul.u32 4, %s27
      %p1119 = scmp.lt.s32.totalorder %s1118, 7
      %s1120 = scalar_select %p1119, %s1118, 7
      %s1121 = smul.addr %s1120, 8
      %s1122 = scalar_lea.vmem %s14, %s1121
      // Predicated region
      $region77: #{_lambda_.1} parent=75 // pred_check
        %p1123 = pneg %p349
      $region78: #{_lambda_.1} parent=75 // pred_check_branch
        %1125 = sbr.rel (%p1123) target = $region80
      $region79: #{_lambda_.1} parent=75 // pred_region
        %s1126 = smul.u32 4, %s27
      $region80: #{_lambda_.1} parent=75 // pred_fallthru
        _
    $region76: #{_lambda_.1} parent=5 // pred_fallthru
      _
    %p1127 = scmp.le.s32.totalorder 2, %s22
    // Predicated region
    $region81: #{_lambda_.1} parent=5 // pred_check
      %p1128 = pneg %p1127
    $region82: #{_lambda_.1} parent=5 // pred_check_branch
      %1130 = sbr.rel (%p1128) target = $region84
    $region83: #{_lambda_.1} parent=5 // pred_region
      %s1131 = ssub.s32 %s22, 2
      // Predicated region
      $region85: #{_lambda_.1} parent=83 // pred_check
        %p1132 = pneg %p355
      $region86: #{_lambda_.1} parent=83 // pred_check_branch
        %1134 = sbr.rel (%p1132) target = $region88
      $region87: #{_lambda_.1} parent=83 // pred_region
        %s1135 = smul.u32 4, %s28
        %p1136 = scmp.lt.s32.totalorder %s1135, 7
        %s1137 = scalar_select %p1136, %s1135, 7
        %s1138 = smul.addr %s1137, 8
        %s1139 = scalar_lea.vmem %s14, %s1138
      $region88: #{_lambda_.1} parent=83 // pred_fallthru
        _
    $region84: #{_lambda_.1} parent=5 // pred_fallthru
      _
  $region6: #{_lambda_.1} parent=0 // loop_footer
    %s26 = sadd.s32 1, %s22
  $region7: #{_lambda_.1} parent=0 // loop_footer_branch
    %21 = sbr.rel target = $region3
  $region8: #{_lambda_.1} parent=0 // loop_exit
    _

</llo_original>
